<compile_context>
chip_gen: v6e
topology: v6e:2x2x1
jax: 0.10.0
libtpu: 0.0.40
codegen_flags: <defaults>
</compile_context>

<pallas_src>
import functools

import jax
import jax.numpy as jnp
from jax.experimental import pallas as pl
from jax.experimental.pallas import tpu as pltpu


def _round_up(x, m):
    return ((x + m - 1) // m) * m


def actor_kernel(x_ref, w1_ref, b1_ref, w2_ref, b2_ref, out_ref, *, n_actions):
    # x: [TB, E] f32, w1: [E, H] bf16, b1: [1, H] f32,
    # w2: [H, A_pad] bf16 (zero-padded cols), b2: [1, A_pad] f32 (zero-padded),
    # out: [TB, A] f32
    x = x_ref[...].astype(jnp.bfloat16)          # in-kernel cast for the MXU

    # Linear(embedding_dim, 64) + ReLU (f32 accumulate / epilogue)
    h = jnp.dot(x, w1_ref[...], preferred_element_type=jnp.float32)
    h = jnp.maximum(h + b1_ref[...], 0.0)

    # Linear(64, n_actions) on the lane-padded action dim (MXU-friendly),
    # then slice back to the real A lanes before the softmax/store.
    logits_pad = jnp.dot(h.astype(jnp.bfloat16), w2_ref[...],
                         preferred_element_type=jnp.float32) + b2_ref[...]
    logits = logits_pad[:, :n_actions]

    # Discrete action head: numerically-stable softmax, exact normalization.
    m = jnp.max(logits, axis=-1, keepdims=True)
    e = jnp.exp(logits - m)
    denom = jnp.sum(e, axis=-1, keepdims=True)
    out_ref[...] = (e / denom).astype(out_ref.dtype)


def prepare_actor_params(w1, b1, w2, b2):
    """One-time parameter preparation (pad / cast hoisted out of the hot path)."""
    H, A = w2.shape
    A_pad = _round_up(max(A, 128), 128)
    w2_pad = jnp.zeros((H, A_pad), dtype=w2.dtype).at[:, :A].set(w2)
    b2_pad = jnp.zeros((1, A_pad), dtype=jnp.float32).at[:, :A].set(
        jnp.reshape(b2, (1, -1)).astype(jnp.float32))
    return {
        "w1": w1.astype(jnp.bfloat16),
        "b1": jnp.reshape(b1, (1, -1)).astype(jnp.float32),
        "w2": w2_pad.astype(jnp.bfloat16),
        "b2": b2_pad,
        "n_actions": A,
    }


def actor_forward(embedding, params, *, max_batch_tile=2048):
    B, E = embedding.shape
    w1, b1, w2, b2 = params["w1"], params["b1"], params["w2"], params["b2"]
    A = params["n_actions"]
    H = w1.shape[1]
    A_pad = w2.shape[1]

    # Batch tiling: TB rows per grid step; no padding of B (ragged final block
    # is handled by Pallas; all kernel ops are row-wise independent).
    TB = min(max_batch_tile, _round_up(B, 8))
    # v7x: guarantee >=2 grid steps when the batch allows it so the "parallel"
    # axis shards across both TensorCores (no-op on v5e/v6e's single TC).
    if B >= 16 and pl.cdiv(B, TB) < 2:
        TB = max(8, _round_up(pl.cdiv(B, 2), 8))
    grid = (pl.cdiv(B, TB),)

    cost = pl.CostEstimate(
        flops=2 * B * (E * H + H * A_pad),
        transcendentals=B * A,                              # exp lanes
        bytes_accessed=(B * E * 4                           # x (f32 in)
                        + E * H * 2 + H * 4                 # w1 bf16 + b1 f32
                        + H * A_pad * 2 + A_pad * 4         # w2 bf16 + b2 f32
                        + B * A * 4),                       # probs (f32 out, A=4)
    )

    kernel = functools.partial(actor_kernel, n_actions=A)

    return pl.pallas_call(
        kernel,
        out_shape=jax.ShapeDtypeStruct((B, A), jnp.float32),
        grid=grid,
        in_specs=[
            pl.BlockSpec((TB, E), lambda i: (i, 0)),        # x: tiled over batch
            pl.BlockSpec((E, H), lambda i: (0, 0)),         # w1: VMEM-resident
            pl.BlockSpec((1, H), lambda i: (0, 0)),         # b1: resident
            pl.BlockSpec((H, A_pad), lambda i: (0, 0)),     # w2: resident
            pl.BlockSpec((1, A_pad), lambda i: (0, 0)),     # b2: resident
        ],
        out_specs=pl.BlockSpec((TB, A), lambda i: (i, 0)),  # unpadded output
        compiler_params=pltpu.CompilerParams(
            dimension_semantics=("parallel",)               # megacore sharding
        ),
        cost_estimate=cost,
    )(embedding, w1, b1, w2, b2)


def reference_forward(embedding, w1, b1, w2, b2):
    h = jnp.maximum(embedding @ w1 + jnp.reshape(b1, (1, -1)), 0.0)
    logits = h @ w2 + jnp.reshape(b2, (1, -1))
    return jax.nn.softmax(logits, axis=-1)


# TODO(synk): sample()/distribution()/update() (categorical sampling, log_prob,
# BCELoss) are not part of forward() and are left to the host-side JAX code.

if __name__ == "__main__":
    key = jax.random.PRNGKey(0)

    batch = 8
    embedding_dim = 32
    hidden = 64          # nn.Linear(embedding_dim, 64)
    n_actions = 4        # head.input_shape[-1] for a Discrete(4) action space

    k_x, k_w1, k_b1, k_w2, k_b2 = jax.random.split(key, 5)

    embedding = jax.random.normal(k_x, (batch, embedding_dim), dtype=jnp.float32)

    # Deterministic PyTorch-Linear-style init: U(-1/sqrt(fan_in), 1/sqrt(fan_in))
    lim1 = 1.0 / jnp.sqrt(embedding_dim)
    lim2 = 1.0 / jnp.sqrt(hidden)
    w1 = jax.random.uniform(k_w1, (embedding_dim, hidden), jnp.float32, -lim1, lim1)
    b1 = jax.random.uniform(k_b1, (hidden,), jnp.float32, -lim1, lim1)
    w2 = jax.random.uniform(k_w2, (hidden, n_actions), jnp.float32, -lim2, lim2)
    b2 = jax.random.uniform(k_b2, (n_actions,), jnp.float32, -lim2, lim2)

    params = prepare_actor_params(w1, b1, w2, b2)   # once, outside the hot path
    out = jax.block_until_ready(actor_forward(embedding, params))

    ref = reference_forward(embedding, w1, b1, w2, b2)
    assert out.shape == (batch, n_actions)
    # bf16 MXU operands -> loosened tolerance vs f32 reference.
    assert jnp.allclose(out, ref, atol=2e-2, rtol=2e-2)
    # Exact normalization: rows sum to 1 up to float rounding.
    assert jnp.allclose(jnp.sum(out, axis=-1), 1.0, atol=1e-3)

    print("KERNEL_OK")
</pallas_src>

<mosaic_0001>
module attributes {stable_mosaic.version = 11 : i64} {
  func.func @actor_kernel(%arg0: i32, %arg1: memref<8x32xf32, #tpu.memory_space<vmem>>, %arg2: memref<32x64xbf16, #tpu.memory_space<vmem>>, %arg3: memref<1x64xf32, #tpu.memory_space<vmem>>, %arg4: memref<64x128xbf16, #tpu.memory_space<vmem>>, %arg5: memref<1x128xf32, #tpu.memory_space<vmem>>, %arg6: memref<8x4xf32, #tpu.memory_space<vmem>>) attributes {dimension_semantics = [#tpu.dimension_semantics<parallel>], iteration_bounds = array<i64: 1>, scalar_prefetch = 0 : i64, scratch_operands = 0 : i64, tpu.core_type = #tpu.core_type<tc>, window_params = [{transform_indices = @transform_0, window_bounds = array<i64: 8, 32>}, {pipeline_mode = #tpu.pipeline_mode<synchronous>, transform_indices = @transform_1, window_bounds = array<i64: 32, 64>}, {pipeline_mode = #tpu.pipeline_mode<synchronous>, transform_indices = @transform_2, window_bounds = array<i64: 1, 64>}, {pipeline_mode = #tpu.pipeline_mode<synchronous>, transform_indices = @transform_3, window_bounds = array<i64: 64, 128>}, {pipeline_mode = #tpu.pipeline_mode<synchronous>, transform_indices = @transform_4, window_bounds = array<i64: 1, 128>}, {transform_indices = @transform_5, window_bounds = array<i64: 8, 4>}]} {
    %c0 = arith.constant 0 : index
    %c0_0 = arith.constant 0 : index
    %0 = vector.load %arg1[%c0, %c0_0] : memref<8x32xf32, #tpu.memory_space<vmem>>, vector<8x32xf32>
    %1 = arith.truncf %0 : vector<8x32xf32> to vector<8x32xbf16>
    %c0_1 = arith.constant 0 : index
    %c0_2 = arith.constant 0 : index
    %2 = vector.load %arg2[%c0_1, %c0_2] : memref<32x64xbf16, #tpu.memory_space<vmem>>, vector<32x64xbf16>
    %cst = arith.constant dense<0.000000e+00> : vector<8x64xf32>
    %3 = tpu.matmul %1, %2, %cst {dimension_numbers = #tpu.dot_dimension_numbers<[1], [0], [0], [1], [0, 0, 1, 1], [], []>} : vector<8x32xbf16>, vector<32x64xbf16>, vector<8x64xf32> -> vector<8x64xf32>
    %c0_3 = arith.constant 0 : index
    %c0_4 = arith.constant 0 : index
    %4 = vector.load %arg3[%c0_3, %c0_4] : memref<1x64xf32, #tpu.memory_space<vmem>>, vector<1x64xf32>
    %5 = vector.broadcast %4 : vector<1x64xf32> to vector<8x64xf32>
    %6 = arith.addf %3, %5 : vector<8x64xf32>
    %cst_5 = arith.constant 0.000000e+00 : f32
    %7 = vector.broadcast %cst_5 : f32 to vector<8x64xf32>
    %8 = arith.maximumf %6, %7 : vector<8x64xf32>
    %9 = arith.truncf %8 : vector<8x64xf32> to vector<8x64xbf16>
    %c0_6 = arith.constant 0 : index
    %c0_7 = arith.constant 0 : index
    %10 = vector.load %arg4[%c0_6, %c0_7] : memref<64x128xbf16, #tpu.memory_space<vmem>>, vector<64x128xbf16>
    %cst_8 = arith.constant dense<0.000000e+00> : vector<8x128xf32>
    %11 = tpu.matmul %9, %10, %cst_8 {dimension_numbers = #tpu.dot_dimension_numbers<[1], [0], [0], [1], [0, 0, 1, 1], [], []>} : vector<8x64xbf16>, vector<64x128xbf16>, vector<8x128xf32> -> vector<8x128xf32>
    %c0_9 = arith.constant 0 : index
    %c0_10 = arith.constant 0 : index
    %12 = vector.load %arg5[%c0_9, %c0_10] : memref<1x128xf32, #tpu.memory_space<vmem>>, vector<1x128xf32>
    %13 = vector.broadcast %12 : vector<1x128xf32> to vector<8x128xf32>
    %14 = arith.addf %11, %13 : vector<8x128xf32>
    %15 = vector.extract_strided_slice %14 {offsets = [0, 0], sizes = [8, 4], strides = [1, 1]} : vector<8x128xf32> to vector<8x4xf32>
    %cst_11 = arith.constant dense<0xFF800000> : vector<8xf32>
    %16 = vector.multi_reduction <maximumf>, %15, %cst_11 [1] : vector<8x4xf32> to vector<8xf32>
    %17 = vector.shape_cast %16 : vector<8xf32> to vector<8x1xf32>
    %18 = vector.broadcast %17 : vector<8x1xf32> to vector<8x4xf32>
    %19 = arith.subf %15, %18 : vector<8x4xf32>
    %20 = math.exp %19 : vector<8x4xf32>
    %cst_12 = arith.constant dense<0.000000e+00> : vector<8xf32>
    %21 = vector.multi_reduction <add>, %20, %cst_12 [1] : vector<8x4xf32> to vector<8xf32>
    %22 = vector.shape_cast %21 : vector<8xf32> to vector<8x1xf32>
    %23 = vector.broadcast %22 : vector<8x1xf32> to vector<8x4xf32>
    %24 = arith.divf %20, %23 : vector<8x4xf32>
    %c0_13 = arith.constant 0 : index
    %c0_14 = arith.constant 0 : index
    %25 = vector.load %arg6[%c0_13, %c0_14] : memref<8x4xf32, #tpu.memory_space<vmem>>, vector<8x4xf32>
    tpu.vector_store %arg6[%c0_13, %c0_14], %24 {strides = array<i32>} : memref<8x4xf32, #tpu.memory_space<vmem>>, vector<8x4xf32>,
    return
  }
  func.func @transform_0(%arg0: i32) -> (i32, i32) {
    %c0_i32 = arith.constant 0 : i32
    %c0_i32_0 = arith.constant 0 : i32
    return %arg0, %c0_i32 : i32, i32
  }
  func.func @transform_1(%arg0: i32) -> (i32, i32) {
    %c0_i32 = arith.constant 0 : i32
    %c0_i32_0 = arith.constant 0 : i32
    %c0_i32_1 = arith.constant 0 : i32
    return %c0_i32, %c0_i32_0 : i32, i32
  }
  func.func @transform_2(%arg0: i32) -> (i32, i32) {
    %c0_i32 = arith.constant 0 : i32
    %c0_i32_0 = arith.constant 0 : i32
    %c0_i32_1 = arith.constant 0 : i32
    return %c0_i32, %c0_i32_0 : i32, i32
  }
  func.func @transform_3(%arg0: i32) -> (i32, i32) {
    %c0_i32 = arith.constant 0 : i32
    %c0_i32_0 = arith.constant 0 : i32
    %c0_i32_1 = arith.constant 0 : i32
    return %c0_i32, %c0_i32_0 : i32, i32
  }
  func.func @transform_4(%arg0: i32) -> (i32, i32) {
    %c0_i32 = arith.constant 0 : i32
    %c0_i32_0 = arith.constant 0 : i32
    %c0_i32_1 = arith.constant 0 : i32
    return %c0_i32, %c0_i32_0 : i32, i32
  }
  func.func @transform_5(%arg0: i32) -> (i32, i32) {
    %c0_i32 = arith.constant 0 : i32
    %c0_i32_0 = arith.constant 0 : i32
    return %arg0, %c0_i32 : i32, i32
  }
}

</mosaic_0001>

<llo_original>
// kernel: tpu_custom_call.1
$region0: #{tpu_custom_call.1}
  #allocation0 [shape = 'u32[]', space=smem, size = 0x4, offset = 0x4, fixed_abs, tag = 'smem constant byte address 0x4 - core index']
  #allocation1 [shape = 'u32[144,128]{1,0:T(1,128)}', space=vmem, size = 0x12000, scoped, tag = 'internal scratch']
  %s0 = inlined_call_operand.hbm [shape: f32[8,32], index: 0, kind: input, shape index: {}]
  %s1 = inlined_call_operand.hbm [shape: bf16[32,64], index: 1, kind: input, shape index: {}]
  %s2 = inlined_call_operand.vmem [shape: f32[1,64], index: 2, kind: input, shape index: {}]
  %s3 = inlined_call_operand.hbm [shape: bf16[64,128], index: 3, kind: input, shape index: {}]
  %s4 = inlined_call_operand.vmem [shape: f32[1,128], index: 4, kind: input, shape index: {}]
  %s5 = inlined_call_operand.vmem [shape: f32[8,4], index: 5, kind: output, shape index: {}]
  %s6 = sld [smem:[#allocation0]]
  $region42: #{tpu_custom_call.1} parent=0
    _
  %s8 = ssub.s32 1, %s6
  %s9 = scalar_select 0, %s8, %s6
  $region1: #{tpu_custom_call.1} parent=0
    #allocation2 [shape = 'u8[4096]{0}', space=vmem, size = 0x1000, scoped, tag = 'input window, operand 0, single buffered']
    #allocation3 [shape = 's32[1]{0}', space=sflag, size = 0x4, scoped, tag = 'scoped memory for tpu_custom_call.1']
    #allocation4 [shape = 'u8[8192]{0}', space=vmem, size = 0x2000, scoped, tag = 'input window, operand 1, single buffered']
    #allocation5 [shape = 's32[1]{0}', space=sflag, size = 0x4, scoped, tag = 'scoped memory for tpu_custom_call.1']
    #allocation6 [shape = 'u8[16384]{0}', space=vmem, size = 0x4000, scoped, tag = 'input window, operand 3, single buffered']
    %10 = vsyncpa [#allocation3], 0
    %11 = vsyncpa [#allocation5], 0
    // Predicated region
    $region2: #{tpu_custom_call.1} parent=1 // pred_check
      _
    $region3: #{tpu_custom_call.1} parent=1 // pred_check_branch
      %13 = sbr.rel (0) target = $region5
    $region4: #{tpu_custom_call.1} parent=1 // pred_region
      %s15 = ssub.s32 128, 128
      %16 = vsyncadd [#allocation3], %s15
      %s18 = sshll.u32 [#allocation2], 4
      %s19 = int_to_ptr.vmem [resolvable:$true] %s18
      %21 = dma.hbm_to_vmem [thread:$0]  %s0, 128, %s19, [#allocation3]
    $region5: #{tpu_custom_call.1} parent=1 // pred_fallthru
      _
    // Predicated region
    $region6: #{tpu_custom_call.1} parent=1 // pred_check
      _
    $region7: #{tpu_custom_call.1} parent=1 // pred_check_branch
      %23 = sbr.rel (0) target = $region9
    $region8: #{tpu_custom_call.1} parent=1 // pred_region
      %s25 = ssub.s32 256, 256
      %26 = vsyncadd [#allocation5], %s25
      %s27 = sshll.u32 [#allocation4], 4
      %s28 = int_to_ptr.vmem [resolvable:$true] %s27
      %33 = dma.hbm_to_vmem [thread:$0]  %s1, 256, %s28, [#allocation5], 64, 64, 4
    $region9: #{tpu_custom_call.1} parent=1 // pred_fallthru
      _
    // Predicated region
    $region10: #{tpu_custom_call.1} parent=1 // pred_check
      _
    $region11: #{tpu_custom_call.1} parent=1 // pred_check_branch
      %35 = sbr.rel (0) target = $region13
    $region12: #{tpu_custom_call.1} parent=1 // pred_region
      _
    $region13: #{tpu_custom_call.1} parent=1 // pred_fallthru
      _
    // Predicated region
    $region14: #{tpu_custom_call.1} parent=1 // pred_check
      _
    $region15: #{tpu_custom_call.1} parent=1 // pred_check_branch
      %37 = sbr.rel (0) target = $region17
    $region16: #{tpu_custom_call.1} parent=1 // pred_region
      %s39 = ssub.s32 512, 512
      %40 = vsyncadd [#allocation5], %s39
      %s41 = sshll.u32 [#allocation6], 4
      %s42 = int_to_ptr.vmem [resolvable:$true] %s41
      %47 = dma.hbm_to_vmem [thread:$0]  %s3, 512, %s42, [#allocation5], 64, 64, 4
    $region17: #{tpu_custom_call.1} parent=1 // pred_fallthru
      _
    // Predicated region
    $region18: #{tpu_custom_call.1} parent=1 // pred_check
      _
    $region19: #{tpu_custom_call.1} parent=1 // pred_check_branch
      %49 = sbr.rel (0) target = $region21
    $region20: #{tpu_custom_call.1} parent=1 // pred_region
      _
    $region21: #{tpu_custom_call.1} parent=1 // pred_fallthru
      _
    // Predicated region
    $region22: #{tpu_custom_call.1} parent=1 // pred_check
      _
    $region23: #{tpu_custom_call.1} parent=1 // pred_check_branch
      %51 = sbr.rel (0) target = $region25
    $region24: #{tpu_custom_call.1} parent=1 // pred_region
      %52 = dma.done [#allocation3], 128
    $region25: #{tpu_custom_call.1} parent=1 // pred_fallthru
      _
    // Predicated region
    $region26: #{tpu_custom_call.1} parent=1 // pred_check
      _
    $region27: #{tpu_custom_call.1} parent=1 // pred_check_branch
      %54 = sbr.rel (0) target = $region29
    $region28: #{tpu_custom_call.1} parent=1 // pred_region
      %55 = dma.done [#allocation5], 256
    $region29: #{tpu_custom_call.1} parent=1 // pred_fallthru
      _
    // Predicated region
    $region30: #{tpu_custom_call.1} parent=1 // pred_check
      _
    $region31: #{tpu_custom_call.1} parent=1 // pred_check_branch
      %57 = sbr.rel (0) target = $region33
    $region32: #{tpu_custom_call.1} parent=1 // pred_region
      %58 = dma.done [#allocation5], 512
    $region33: #{tpu_custom_call.1} parent=1 // pred_fallthru
      _
    %v60 = vld [vmem:[#allocation2] sm:$0xff]
    %v61 = vpack.c.bf16 %v60, %v60
    %v62 = vld [vmem:[#allocation4] sm:$0xf]
    %v63 = vld [vmem:[#allocation4 + $0x4] sm:$0xf]
    %v64 = vld [vmem:[#allocation4 + $0x8] sm:$0xf]
    %v65 = vld [vmem:[#allocation4 + $0xc] sm:$0xf]
    %v66 = vld [vmem:[%s2] sm:$0x1]
    %v68 = vlaneseq
    %v69 = vshrl.u32 %v68, 7
    %v70 = vsub.s32 0, %v69
    %v71 = vrot.slane %v66, %v70
    %v77 = vunpack.c.l.b16 %v62
    %v78 = vunpack.c.l.b16 %v63
    %v79 = vunpack.c.l.b16 %v64
    %v80 = vunpack.c.l.b16 %v65
    %v81 = vpack.c.b16 %v78, %v77
    %v82 = vpack.c.b16 %v80, %v79
    %vm85 = vcmask 261120
    %v87 = vsel %vm85, %v61, 0
    %89 = vmatprep.subr.bf16.mxu0 0
    %90 = vmatpush1.bf16.msra.mxu0 0
    %91 = vmatprep.subr.bf16.mxu0 0
    %92 = vmatpush1.bf16.msra.mxu0 0
    %93 = vmatprep.subr.bf16.mxu0 0
    %94 = vmatpush1.bf16.msra.mxu0 0
    %95 = vmatprep.subr.bf16.mxu0 0
    %96 = vmatpush1.bf16.msra.mxu0 0
    %97 = vmatprep.subr.bf16.mxu0 0
    %98 = vmatpush1.bf16.msra.mxu0 0
    %99 = vmatprep.subr.bf16.mxu0 0
    %100 = vmatpush1.bf16.msra.mxu0 0
    %101 = vmatprep.subr.bf16.mxu0 0
    %102 = vmatpush1.bf16.msra.mxu0 %v82
    %103 = vmatprep.subr.bf16.mxu0 0
    %104 = vmatpush1.bf16.msra.mxu0 %v81
    %105 = vmatprep.subr.bf16.mxu0 0
    %106 = vmatpush2.bf16.msra.mxu0 0
    %107 = vmatprep.subr.bf16.mxu0 0
    %108 = vmatpush2.bf16.msra.mxu0 0
    %109 = vmatprep.subr.bf16.mxu0 0
    %110 = vmatpush2.bf16.msra.mxu0 0
    %111 = vmatprep.subr.bf16.mxu0 0
    %112 = vmatpush2.bf16.msra.mxu0 0
    %113 = vmatprep.subr.bf16.mxu0 0
    %114 = vmatpush2.bf16.msra.mxu0 0
    %115 = vmatprep.subr.bf16.mxu0 0
    %116 = vmatpush2.bf16.msra.mxu0 0
    %117 = vmatprep.subr.bf16.mxu0 0
    %118 = vmatpush2.bf16.msra.mxu0 0
    %119 = vmatprep.subr.bf16.mxu0 0
    %120 = vmatpush2.bf16.msra.mxu0 0
    %121 = vmatprep.mubr.bf16.mxu0 0
    %122 = vmatmul.mubr.bf16.gmra.mxu0 %v87
    %v123 = vpop.f32.mrf.mxu0
    %v124 = vadd.f32 %v71, %v123
    %v125 = vpop.f32.mrf.mxu0
    %v126 = vpop.f32.mrf.mxu0
    %v127 = vpop.f32.mrf.mxu0
    %128 = vdwg.mxu0
    %v129 = vmax.f32 %v124, 0.0
    %v130 = vpack.c.bf16 %v129, %v129
    %v131 = vld [vmem:[#allocation6] sm:$0xf]
    %v132 = vld [vmem:[#allocation6 + $0x4] sm:$0xf]
    %v133 = vld [vmem:[#allocation6 + $0x8] sm:$0xf]
    %v134 = vld [vmem:[#allocation6 + $0xc] sm:$0xf]
    %v135 = vld [vmem:[#allocation6 + $0x10] sm:$0xf]
    %v136 = vld [vmem:[#allocation6 + $0x14] sm:$0xf]
    %v137 = vld [vmem:[#allocation6 + $0x18] sm:$0xf]
    %v138 = vld [vmem:[#allocation6 + $0x1c] sm:$0xf]
    %v139 = vld [vmem:[%s4] sm:$0x1]
    %v141 = vlaneseq
    %v142 = vshrl.u32 %v141, 7
    %v143 = vsub.s32 0, %v142
    %v144 = vrot.slane %v139, %v143
    %v154 = vunpack.c.l.b16 %v131
    %v155 = vunpack.c.l.b16 %v132
    %v156 = vunpack.c.l.b16 %v133
    %v157 = vunpack.c.l.b16 %v134
    %v158 = vunpack.c.l.b16 %v135
    %v159 = vunpack.c.l.b16 %v136
    %v160 = vunpack.c.l.b16 %v137
    %v161 = vunpack.c.l.b16 %v138
    %v162 = vpack.c.b16 %v155, %v154
    %v163 = vpack.c.b16 %v157, %v156
    %v164 = vpack.c.b16 %v159, %v158
    %v165 = vpack.c.b16 %v161, %v160
    %vm170 = vcmask 523264
    %v172 = vsel %vm170, %v130, 0
    %174 = vmatprep.subr.bf16.mxu0 0
    %175 = vmatpush1.bf16.msra.mxu0 0
    %176 = vmatprep.subr.bf16.mxu0 0
    %177 = vmatpush1.bf16.msra.mxu0 0
    %178 = vmatprep.subr.bf16.mxu0 0
    %179 = vmatpush1.bf16.msra.mxu0 0
    %180 = vmatprep.subr.bf16.mxu0 0
    %181 = vmatpush1.bf16.msra.mxu0 0
    %182 = vmatprep.subr.bf16.mxu0 0
    %183 = vmatpush1.bf16.msra.mxu0 %v165
    %184 = vmatprep.subr.bf16.mxu0 0
    %185 = vmatpush1.bf16.msra.mxu0 %v164
    %186 = vmatprep.subr.bf16.mxu0 0
    %187 = vmatpush1.bf16.msra.mxu0 %v163
    %188 = vmatprep.subr.bf16.mxu0 0
    %189 = vmatpush1.bf16.msra.mxu0 %v162
    %190 = vmatprep.subr.bf16.mxu0 0
    %191 = vmatpush2.bf16.msra.mxu0 0
    %192 = vmatprep.subr.bf16.mxu0 0
    %193 = vmatpush2.bf16.msra.mxu0 0
    %194 = vmatprep.subr.bf16.mxu0 0
    %195 = vmatpush2.bf16.msra.mxu0 0
    %196 = vmatprep.subr.bf16.mxu0 0
    %197 = vmatpush2.bf16.msra.mxu0 0
    %198 = vmatprep.subr.bf16.mxu0 0
    %199 = vmatpush2.bf16.msra.mxu0 0
    %200 = vmatprep.subr.bf16.mxu0 0
    %201 = vmatpush2.bf16.msra.mxu0 0
    %202 = vmatprep.subr.bf16.mxu0 0
    %203 = vmatpush2.bf16.msra.mxu0 0
    %204 = vmatprep.subr.bf16.mxu0 0
    %205 = vmatpush2.bf16.msra.mxu0 0
    %206 = vmatprep.mubr.bf16.mxu0 0
    %207 = vmatmul.mubr.bf16.gmra.mxu0 %v172
    %v208 = vpop.f32.mrf.mxu0
    %v209 = vadd.f32 %v144, %v208
    %v210 = vpop.f32.mrf.mxu0
    %v211 = vpop.f32.mrf.mxu0
    %v212 = vpop.f32.mrf.mxu0
    %213 = vdwg.mxu0
    %vm214 = vcmask 31744
    %v215 = vsel %vm214, %v209, -inf
    %216 = vmax.xlane.f32.xlu0 %v215
    %v217 = vpop.xlane.xlu0 %216
    %v218 = vsub.f32 %v209, %v217
    %v219 = vmul.f32 %v218, 1.442695
    %v220 = vpow.pop %v219
    %v221 = vsel %vm214, %v220, 0.0
    %222 = vadd.xlane.f32.xlu0 %v221
    %v223 = vpop.xlane.xlu0 %222
    %v224 = vrcp.pop %v223
    %v225 = vmul.f32 %v220, %v224
    %226 = vst.msk [vmem:[%s5] sm:$0xff] %vm214, %v225
    // Predicated region
    $region34: #{tpu_custom_call.1} parent=1 // pred_check
      _
    $region35: #{tpu_custom_call.1} parent=1 // pred_check_branch
      %228 = sbr.rel (0) target = $region37
    $region36: #{tpu_custom_call.1} parent=1 // pred_region
      _
    $region37: #{tpu_custom_call.1} parent=1 // pred_fallthru
      _
    // Predicated region
    $region38: #{tpu_custom_call.1} parent=1 // pred_check
      _
    $region39: #{tpu_custom_call.1} parent=1 // pred_check_branch
      %230 = sbr.rel (0) target = $region41
    $region40: #{tpu_custom_call.1} parent=1 // pred_region
      _
    $region41: #{tpu_custom_call.1} parent=1 // pred_fallthru
      _
    %231 = vsyncpa [#allocation3], 1
    %232 = vsyncpa [#allocation5], 1

</llo_original>
